<compile_context>
chip_gen: v7x
topology: tpu7x:2x2x1
jax: 0.10.0
libtpu: 0.0.40
codegen_flags: <defaults>
</compile_context>

<pallas_src>
import math
import numpy as np

import jax
import jax.numpy as jnp
from jax.experimental import pallas as pl
from jax.experimental.pallas import tpu as pltpu

# ------------------------- configuration (small shapes) ----------------------
EMBED_DIM = 32          # text_encoder.hidden_size (384 for MiniLM; small here)
N_PROMPTS = 8           # len(prompts)
H1 = 128                # hyper-conv stage 1 channels (lane-dense)
H2 = 128                # hyper-conv stage 2 channels (lane-dense)
LORA_RANK = 4
LORA_CONFIGS = [
    dict(name="q_proj", in_features=32, out_features=32, rank=LORA_RANK),
    dict(name="k_proj", in_features=32, out_features=16, rank=LORA_RANK),
    dict(name="v_proj", in_features=32, out_features=16, rank=LORA_RANK),
    dict(name="o_proj", in_features=32, out_features=32, rank=LORA_RANK),
]
TOTAL_LORA_PARAMS = sum(
    c["rank"] * (c["in_features"] + c["out_features"]) for c in LORA_CONFIGS
)  # = 896 = 7 * 128  (lane-dense output)


def _gelu(x):
    # tanh-approx GELU (EUP-friendly on TPU), computed in f32
    return 0.5 * x * (1.0 + jnp.tanh(0.7978845608028654 * (x + 0.044715 * x * x * x)))


# ------------------------------ fused Pallas kernel ---------------------------
def _fused_decoder_kernel(x_ref, w1_ref, b1_ref, w2_ref, b2_ref, w3_ref, b3_ref,
                          o_ref):
    """Whole decoder for one request; all operands live in VMEM, h1/h2 in vregs.

    Conv (kernel=3, 'same' zero padding) over the prompt axis:
      * +/-1 shifts via pltpu.roll (XLU) + iota row masks (VPU) - no MXU work
      * the three taps are concatenated on the lane axis and consumed by a
        single bf16 MXU dot with K = 3*Cin and f32 accumulation.
    """

    def conv3_gelu(h, w_ref, b_ref):
        n = h.shape[0]
        row = jax.lax.broadcasted_iota(jnp.int32, h.shape, 0)
        # row i of h_m1 is h[i-1]; row 0 is the zero pad (mask out the wrap)
        h_m1 = jnp.where(row == 0, 0.0, pltpu.roll(h, shift=1, axis=0))
        # row i of h_p1 is h[i+1]; row n-1 is the zero pad
        h_p1 = jnp.where(row == n - 1, 0.0, pltpu.roll(h, shift=n - 1, axis=0))
        h_cat = jnp.concatenate([h_m1, h, h_p1], axis=-1).astype(jnp.bfloat16)
        y = (jnp.dot(h_cat, w_ref[...], preferred_element_type=jnp.float32)
             + b_ref[...].astype(jnp.float32))
        return _gelu(y)

    x = x_ref[...].astype(jnp.float32)                  # (N, C)
    h1 = conv3_gelu(x, w1_ref, b1_ref)                  # (N, H1) — stays on chip
    h2 = conv3_gelu(h1, w2_ref, b2_ref)                 # (N, H2) — stays on chip
    # mean-pool: 1/N is folded into W3 at init, so a plain sum-pool suffices
    pooled = jnp.sum(h2, axis=0, keepdims=True).astype(jnp.bfloat16)   # (1, H2)
    o_ref[...] = (jnp.dot(pooled, w3_ref[...], preferred_element_type=jnp.float32)
                  + b3_ref[...].astype(jnp.float32))    # (1, P) lane-dense store


def run_decoder(xb, params):
    """Batched decoder.

    xb: (B, N, C) f32 prompt-embedding batches.  Grid axis B is 'parallel';
    the weight BlockSpecs return block 0 on every step so the bf16 weights
    are DMA'd into VMEM once and stay resident across requests.
    Returns (B, TOTAL_LORA_PARAMS) f32.
    """
    B, n, c = xb.shape
    P = TOTAL_LORA_PARAMS
    flops = B * 2 * (n * 3 * c * H1 + n * 3 * H1 * H2 + H2 * P)
    bytes_accessed = int(xb.size * 4
                         + sum(int(v.size) * 2 for v in params.values())
                         + B * P * 4)
    grid_spec = pltpu.PrefetchScalarGridSpec(
        num_scalar_prefetch=0,
        grid=(B,),
        in_specs=[
            pl.BlockSpec((None, n, c), lambda b: (b, 0, 0)),      # per-request x
            pl.BlockSpec((3 * c, H1), lambda b: (0, 0)),          # W1 (resident)
            pl.BlockSpec((1, H1), lambda b: (0, 0)),              # b1
            pl.BlockSpec((3 * H1, H2), lambda b: (0, 0)),         # W2 (resident)
            pl.BlockSpec((1, H2), lambda b: (0, 0)),              # b2
            pl.BlockSpec((H2, P), lambda b: (0, 0)),              # W3 (resident)
            pl.BlockSpec((1, P), lambda b: (0, 0)),               # b3
        ],
        out_specs=pl.BlockSpec((None, 1, P), lambda b: (b, 0, 0)),
    )
    out = pl.pallas_call(
        _fused_decoder_kernel,
        out_shape=jax.ShapeDtypeStruct((B, 1, P), jnp.float32),
        grid_spec=grid_spec,
        compiler_params=pltpu.CompilerParams(
            dimension_semantics=("parallel",)),
        cost_estimate=pl.CostEstimate(
            flops=flops,
            transcendentals=B * n * (H1 + H2),
            bytes_accessed=bytes_accessed),
    )(xb, params["W1"], params["b1"], params["W2"], params["b2"],
      params["W3"], params["b3"])
    return out[:, 0, :]                                  # (B, P)


# ------------------------------ plain-JAX glue --------------------------------
def init_decoder_params(key):
    """Deterministic synthetic weights for the cascaded hyper-conv decoder.

    Stored bf16 (halves HBM->VMEM DMA); the 1/N mean-pool scale is folded
    into W3 so the kernel only needs a sum-pool.
    """
    k1, k2, k3, k4, k5, k6 = jax.random.split(key, 6)
    s1 = 1.0 / math.sqrt(3 * EMBED_DIM)
    s2 = 1.0 / math.sqrt(3 * H1)
    s3 = 1.0 / math.sqrt(H2)
    return dict(
        W1=(jax.random.normal(k1, (3 * EMBED_DIM, H1), jnp.float32) * s1
            ).astype(jnp.bfloat16),
        b1=(jax.random.normal(k2, (1, H1), jnp.float32) * 0.01).astype(jnp.bfloat16),
        W2=(jax.random.normal(k3, (3 * H1, H2), jnp.float32) * s2
            ).astype(jnp.bfloat16),
        b2=(jax.random.normal(k4, (1, H2), jnp.float32) * 0.01).astype(jnp.bfloat16),
        # mean-pool's 1/N folded in here
        W3=((jax.random.normal(k5, (H2, TOTAL_LORA_PARAMS), jnp.float32) * s3)
            / N_PROMPTS).astype(jnp.bfloat16),
        b3=(jax.random.normal(k6, (1, TOTAL_LORA_PARAMS), jnp.float32) * 0.01
            ).astype(jnp.bfloat16),
    )


def split_parameters(param_vector):
    """Mirror of DragAndDropLLM._split_parameters."""
    param_dict = {}
    idx = 0
    for cfg in LORA_CONFIGS:
        r, fin, fout = cfg["rank"], cfg["in_features"], cfg["out_features"]
        a_size, b_size = r * fin, fout * r
        layer = param_vector[idx: idx + a_size + b_size]
        param_dict[cfg["name"]] = {
            "lora_A": layer[:a_size].reshape(r, fin),
            "lora_B": layer[a_size:].reshape(fout, r),
        }
        idx += a_size + b_size
    return param_dict


def dnd_forward(prompt_embeddings, params):
    """DragAndDropLLM.forward: embeddings -> generated LoRA parameter dict."""
    # PyTorch: (N,C) -> unsqueeze(0).unsqueeze(2) -> (B=1, N, L=1, C); the
    # size-1 L axis is kept implicit, B=1 becomes the (parallel) grid axis.
    x = prompt_embeddings.astype(jnp.float32)[None]      # (1, N, C)
    generated = run_decoder(x, params)                   # (1, P)
    return split_parameters(generated[0])                # .squeeze(0) + split


# --------------------------- numpy float64 reference --------------------------
def _f64(a):
    return np.asarray(jnp.asarray(a, jnp.float32), np.float64)


def _reference_param_vector(prompt_embeddings, params):
    def gelu(v):
        return 0.5 * v * (1.0 + np.tanh(0.7978845608028654 * (v + 0.044715 * v ** 3)))

    def im2col_k3(h):
        z = np.zeros((1, h.shape[1]), h.dtype)
        h_m1 = np.concatenate([z, h[:-1]], axis=0)
        h_p1 = np.concatenate([h[1:], h[:0], z], axis=0) if False else \
            np.concatenate([h[1:], z], axis=0)
        return np.concatenate([h_m1, h, h_p1], axis=-1)

    x = np.asarray(prompt_embeddings, np.float64)
    W1, b1 = _f64(params["W1"]), _f64(params["b1"])
    W2, b2 = _f64(params["W2"]), _f64(params["b2"])
    W3, b3 = _f64(params["W3"]), _f64(params["b3"])
    h1 = gelu(im2col_k3(x) @ W1 + b1)
    h2 = gelu(im2col_k3(h1) @ W2 + b2)
    # mean-pool @ original W3  ==  sum-pool @ (W3 / N); 1/N is folded into W3
    return (h2.sum(axis=0, keepdims=True) @ W3 + b3)[0]


# ----------------------------------- main -------------------------------------
if __name__ == "__main__":
    key = jax.random.PRNGKey(0)
    k_emb, k_emb2, k_dec = jax.random.split(key, 3)

    # synthetic prompt embeddings standing in for SentenceBERTEncoder(prompts)
    prompt_embeddings = jax.random.normal(k_emb, (N_PROMPTS, EMBED_DIM), jnp.float32)
    decoder_params = init_decoder_params(k_dec)

    fwd = jax.jit(dnd_forward)
    param_dict = fwd(prompt_embeddings, decoder_params)
    jax.tree_util.tree_map(jax.block_until_ready, param_dict)

    # shape checks (mirror of _split_parameters contract)
    flat_chunks = []
    for cfg in LORA_CONFIGS:
        mats = param_dict[cfg["name"]]
        assert mats["lora_A"].shape == (cfg["rank"], cfg["in_features"])
        assert mats["lora_B"].shape == (cfg["out_features"], cfg["rank"])
        flat_chunks.append(np.asarray(mats["lora_A"]).reshape(-1))
        flat_chunks.append(np.asarray(mats["lora_B"]).reshape(-1))
    got_vec = np.concatenate(flat_chunks)

    # numeric sanity check vs. float64 reference (bf16 MXU path => loose tol)
    ref_vec = _reference_param_vector(prompt_embeddings, decoder_params)
    assert np.all(np.isfinite(got_vec))
    assert got_vec.shape == ref_vec.shape == (TOTAL_LORA_PARAMS,)
    assert np.allclose(got_vec, ref_vec, atol=5e-2, rtol=5e-2)

    # batched path: 'parallel' grid over requests, weights stay VMEM-resident
    emb2 = jax.random.normal(k_emb2, (N_PROMPTS, EMBED_DIM), jnp.float32)
    xb = jnp.stack([prompt_embeddings, emb2], axis=0)          # (2, N, C)
    outs = jax.block_until_ready(jax.jit(run_decoder)(xb, decoder_params))
    ref2 = _reference_param_vector(emb2, decoder_params)
    assert outs.shape == (2, TOTAL_LORA_PARAMS)
    assert np.allclose(np.asarray(outs[0]), ref_vec, atol=5e-2, rtol=5e-2)
    assert np.allclose(np.asarray(outs[1]), ref2, atol=5e-2, rtol=5e-2)

    print("KERNEL_OK")
</pallas_src>

<mosaic_0001>
module attributes {stable_mosaic.version = 11 : i64} {
  func.func @_fused_decoder_kernel(%arg0: i32, %arg1: memref<1x8x32xf32, #tpu.memory_space<vmem>>, %arg2: memref<96x128xbf16, #tpu.memory_space<vmem>>, %arg3: memref<1x128xbf16, #tpu.memory_space<vmem>>, %arg4: memref<384x128xbf16, #tpu.memory_space<vmem>>, %arg5: memref<1x128xbf16, #tpu.memory_space<vmem>>, %arg6: memref<128x896xbf16, #tpu.memory_space<vmem>>, %arg7: memref<1x896xbf16, #tpu.memory_space<vmem>>, %arg8: memref<1x1x896xf32, #tpu.memory_space<vmem>>) attributes {dimension_semantics = [#tpu.dimension_semantics<parallel>], iteration_bounds = array<i64: 1>, scalar_prefetch = 0 : i64, scratch_operands = 0 : i64, tpu.core_type = #tpu.core_type<tc>, window_params = [{transform_indices = @transform_0, window_bounds = array<i64: 1, 8, 32>}, {pipeline_mode = #tpu.pipeline_mode<synchronous>, transform_indices = @transform_1, window_bounds = array<i64: 96, 128>}, {pipeline_mode = #tpu.pipeline_mode<synchronous>, transform_indices = @transform_2, window_bounds = array<i64: 1, 128>}, {pipeline_mode = #tpu.pipeline_mode<synchronous>, transform_indices = @transform_3, window_bounds = array<i64: 384, 128>}, {pipeline_mode = #tpu.pipeline_mode<synchronous>, transform_indices = @transform_4, window_bounds = array<i64: 1, 128>}, {pipeline_mode = #tpu.pipeline_mode<synchronous>, transform_indices = @transform_5, window_bounds = array<i64: 128, 896>}, {pipeline_mode = #tpu.pipeline_mode<synchronous>, transform_indices = @transform_6, window_bounds = array<i64: 1, 896>}, {transform_indices = @transform_7, window_bounds = array<i64: 1, 1, 896>}]} {
    %c0 = arith.constant 0 : index
    %c0_0 = arith.constant 0 : index
    %c0_1 = arith.constant 0 : index
    %0 = vector.load %arg1[%c0, %c0_0, %c0_1] : memref<1x8x32xf32, #tpu.memory_space<vmem>>, vector<1x8x32xf32>
    %1 = vector.shape_cast %0 : vector<1x8x32xf32> to vector<8x32xf32>
    %2 = tpu.iota {dimensions = array<i32: 0>} : vector<8x32xi32>
    %c0_i32 = arith.constant 0 : i32
    %3 = vector.broadcast %c0_i32 : i32 to vector<8x32xi32>
    %4 = arith.cmpi eq, %2, %3 : vector<8x32xi32>
    %c1_i32 = arith.constant 1 : i32
    %5 = tpu.dynamic_rotate %1 by %c1_i32 dim 0 : vector<8x32xf32>, i32 -> vector<8x32xf32>
    %cst = arith.constant 0.000000e+00 : f32
    %6 = vector.broadcast %cst : f32 to vector<8x32xf32>
    %7 = arith.select %4, %6, %5 : vector<8x32xi1>, vector<8x32xf32>
    %c7_i32 = arith.constant 7 : i32
    %8 = vector.broadcast %c7_i32 : i32 to vector<8x32xi32>
    %9 = arith.cmpi eq, %2, %8 : vector<8x32xi32>
    %c7_i32_2 = arith.constant 7 : i32
    %10 = tpu.dynamic_rotate %1 by %c7_i32_2 dim 0 : vector<8x32xf32>, i32 -> vector<8x32xf32>
    %cst_3 = arith.constant 0.000000e+00 : f32
    %11 = vector.broadcast %cst_3 : f32 to vector<8x32xf32>
    %12 = arith.select %9, %11, %10 : vector<8x32xi1>, vector<8x32xf32>
    %13 = tpu.concatenate %7, %1, %12 in 1 : vector<8x32xf32>, vector<8x32xf32>, vector<8x32xf32> -> vector<8x96xf32>
    %14 = arith.truncf %13 : vector<8x96xf32> to vector<8x96xbf16>
    %c0_4 = arith.constant 0 : index
    %c0_5 = arith.constant 0 : index
    %15 = vector.load %arg2[%c0_4, %c0_5] : memref<96x128xbf16, #tpu.memory_space<vmem>>, vector<96x128xbf16>
    %cst_6 = arith.constant dense<0.000000e+00> : vector<8x128xf32>
    %16 = tpu.matmul %14, %15, %cst_6 {dimension_numbers = #tpu.dot_dimension_numbers<[1], [0], [0], [1], [0, 0, 1, 1], [], []>} : vector<8x96xbf16>, vector<96x128xbf16>, vector<8x128xf32> -> vector<8x128xf32>
    %c0_7 = arith.constant 0 : index
    %c0_8 = arith.constant 0 : index
    %17 = vector.load %arg3[%c0_7, %c0_8] : memref<1x128xbf16, #tpu.memory_space<vmem>>, vector<1x128xbf16>
    %18 = arith.extf %17 : vector<1x128xbf16> to vector<1x128xf32>
    %19 = vector.broadcast %18 : vector<1x128xf32> to vector<8x128xf32>
    %20 = arith.addf %16, %19 : vector<8x128xf32>
    %cst_9 = arith.constant 5.000000e-01 : f32
    %21 = vector.broadcast %cst_9 : f32 to vector<8x128xf32>
    %22 = arith.mulf %21, %20 : vector<8x128xf32>
    %cst_10 = arith.constant 4.471500e-02 : f32
    %23 = vector.broadcast %cst_10 : f32 to vector<8x128xf32>
    %24 = arith.mulf %23, %20 : vector<8x128xf32>
    %25 = arith.mulf %24, %20 : vector<8x128xf32>
    %26 = arith.mulf %25, %20 : vector<8x128xf32>
    %27 = arith.addf %20, %26 : vector<8x128xf32>
    %cst_11 = arith.constant 0.797884583 : f32
    %28 = vector.broadcast %cst_11 : f32 to vector<8x128xf32>
    %29 = arith.mulf %28, %27 : vector<8x128xf32>
    %30 = math.tanh %29 : vector<8x128xf32>
    %cst_12 = arith.constant 1.000000e+00 : f32
    %31 = vector.broadcast %cst_12 : f32 to vector<8x128xf32>
    %32 = arith.addf %31, %30 : vector<8x128xf32>
    %33 = arith.mulf %22, %32 : vector<8x128xf32>
    %34 = tpu.iota {dimensions = array<i32: 0>} : vector<8x128xi32>
    %c0_i32_13 = arith.constant 0 : i32
    %35 = vector.broadcast %c0_i32_13 : i32 to vector<8x128xi32>
    %36 = arith.cmpi eq, %34, %35 : vector<8x128xi32>
    %c1_i32_14 = arith.constant 1 : i32
    %37 = tpu.dynamic_rotate %33 by %c1_i32_14 dim 0 : vector<8x128xf32>, i32 -> vector<8x128xf32>
    %cst_15 = arith.constant 0.000000e+00 : f32
    %38 = vector.broadcast %cst_15 : f32 to vector<8x128xf32>
    %39 = arith.select %36, %38, %37 : vector<8x128xi1>, vector<8x128xf32>
    %c7_i32_16 = arith.constant 7 : i32
    %40 = vector.broadcast %c7_i32_16 : i32 to vector<8x128xi32>
    %41 = arith.cmpi eq, %34, %40 : vector<8x128xi32>
    %c7_i32_17 = arith.constant 7 : i32
    %42 = tpu.dynamic_rotate %33 by %c7_i32_17 dim 0 : vector<8x128xf32>, i32 -> vector<8x128xf32>
    %cst_18 = arith.constant 0.000000e+00 : f32
    %43 = vector.broadcast %cst_18 : f32 to vector<8x128xf32>
    %44 = arith.select %41, %43, %42 : vector<8x128xi1>, vector<8x128xf32>
    %45 = tpu.concatenate %39, %33, %44 in 1 : vector<8x128xf32>, vector<8x128xf32>, vector<8x128xf32> -> vector<8x384xf32>
    %46 = arith.truncf %45 : vector<8x384xf32> to vector<8x384xbf16>
    %c0_19 = arith.constant 0 : index
    %c0_20 = arith.constant 0 : index
    %47 = vector.load %arg4[%c0_19, %c0_20] : memref<384x128xbf16, #tpu.memory_space<vmem>>, vector<384x128xbf16>
    %cst_21 = arith.constant dense<0.000000e+00> : vector<8x128xf32>
    %48 = tpu.matmul %46, %47, %cst_21 {dimension_numbers = #tpu.dot_dimension_numbers<[1], [0], [0], [1], [0, 0, 1, 1], [], []>} : vector<8x384xbf16>, vector<384x128xbf16>, vector<8x128xf32> -> vector<8x128xf32>
    %c0_22 = arith.constant 0 : index
    %c0_23 = arith.constant 0 : index
    %49 = vector.load %arg5[%c0_22, %c0_23] : memref<1x128xbf16, #tpu.memory_space<vmem>>, vector<1x128xbf16>
    %50 = arith.extf %49 : vector<1x128xbf16> to vector<1x128xf32>
    %51 = vector.broadcast %50 : vector<1x128xf32> to vector<8x128xf32>
    %52 = arith.addf %48, %51 : vector<8x128xf32>
    %cst_24 = arith.constant 5.000000e-01 : f32
    %53 = vector.broadcast %cst_24 : f32 to vector<8x128xf32>
    %54 = arith.mulf %53, %52 : vector<8x128xf32>
    %cst_25 = arith.constant 4.471500e-02 : f32
    %55 = vector.broadcast %cst_25 : f32 to vector<8x128xf32>
    %56 = arith.mulf %55, %52 : vector<8x128xf32>
    %57 = arith.mulf %56, %52 : vector<8x128xf32>
    %58 = arith.mulf %57, %52 : vector<8x128xf32>
    %59 = arith.addf %52, %58 : vector<8x128xf32>
    %cst_26 = arith.constant 0.797884583 : f32
    %60 = vector.broadcast %cst_26 : f32 to vector<8x128xf32>
    %61 = arith.mulf %60, %59 : vector<8x128xf32>
    %62 = math.tanh %61 : vector<8x128xf32>
    %cst_27 = arith.constant 1.000000e+00 : f32
    %63 = vector.broadcast %cst_27 : f32 to vector<8x128xf32>
    %64 = arith.addf %63, %62 : vector<8x128xf32>
    %65 = arith.mulf %54, %64 : vector<8x128xf32>
    %cst_28 = arith.constant dense<0.000000e+00> : vector<128xf32>
    %66 = vector.multi_reduction <add>, %65, %cst_28 [0] : vector<8x128xf32> to vector<128xf32>
    %67 = vector.shape_cast %66 : vector<128xf32> to vector<1x128xf32>
    %68 = arith.truncf %67 : vector<1x128xf32> to vector<1x128xbf16>
    %c0_29 = arith.constant 0 : index
    %c0_30 = arith.constant 0 : index
    %69 = vector.load %arg6[%c0_29, %c0_30] : memref<128x896xbf16, #tpu.memory_space<vmem>>, vector<128x896xbf16>
    %cst_31 = arith.constant dense<0.000000e+00> : vector<1x896xf32>
    %70 = tpu.matmul %68, %69, %cst_31 {dimension_numbers = #tpu.dot_dimension_numbers<[1], [0], [0], [1], [0, 0, 1, 1], [], []>} : vector<1x128xbf16>, vector<128x896xbf16>, vector<1x896xf32> -> vector<1x896xf32>
    %c0_32 = arith.constant 0 : index
    %c0_33 = arith.constant 0 : index
    %71 = vector.load %arg7[%c0_32, %c0_33] : memref<1x896xbf16, #tpu.memory_space<vmem>>, vector<1x896xbf16>
    %72 = arith.extf %71 : vector<1x896xbf16> to vector<1x896xf32>
    %73 = arith.addf %70, %72 : vector<1x896xf32>
    %c0_34 = arith.constant 0 : index
    %c0_35 = arith.constant 0 : index
    %c0_36 = arith.constant 0 : index
    %74 = vector.load %arg8[%c0_34, %c0_35, %c0_36] : memref<1x1x896xf32, #tpu.memory_space<vmem>>, vector<1x1x896xf32>
    %75 = vector.shape_cast %74 : vector<1x1x896xf32> to vector<1x896xf32>
    %76 = vector.shape_cast %73 : vector<1x896xf32> to vector<1x1x896xf32>
    tpu.vector_store %arg8[%c0_34, %c0_35, %c0_36], %76 {strides = array<i32>} : memref<1x1x896xf32, #tpu.memory_space<vmem>>, vector<1x1x896xf32>,
    return
  }
  func.func @transform_0(%arg0: i32) -> (i32, i32, i32) {
    %c0_i32 = arith.constant 0 : i32
    %c0_i32_0 = arith.constant 0 : i32
    %c0_i32_1 = arith.constant 0 : i32
    return %arg0, %c0_i32, %c0_i32_0 : i32, i32, i32
  }
  func.func @transform_1(%arg0: i32) -> (i32, i32) {
    %c0_i32 = arith.constant 0 : i32
    %c0_i32_0 = arith.constant 0 : i32
    %c0_i32_1 = arith.constant 0 : i32
    return %c0_i32, %c0_i32_0 : i32, i32
  }
  func.func @transform_2(%arg0: i32) -> (i32, i32) {
    %c0_i32 = arith.constant 0 : i32
    %c0_i32_0 = arith.constant 0 : i32
    %c0_i32_1 = arith.constant 0 : i32
    return %c0_i32, %c0_i32_0 : i32, i32
  }
  func.func @transform_3(%arg0: i32) -> (i32, i32) {
    %c0_i32 = arith.constant 0 : i32
    %c0_i32_0 = arith.constant 0 : i32
    %c0_i32_1 = arith.constant 0 : i32
    return %c0_i32, %c0_i32_0 : i32, i32
  }
  func.func @transform_4(%arg0: i32) -> (i32, i32) {
    %c0_i32 = arith.constant 0 : i32
    %c0_i32_0 = arith.constant 0 : i32
    %c0_i32_1 = arith.constant 0 : i32
    return %c0_i32, %c0_i32_0 : i32, i32
  }
  func.func @transform_5(%arg0: i32) -> (i32, i32) {
    %c0_i32 = arith.constant 0 : i32
    %c0_i32_0 = arith.constant 0 : i32
    %c0_i32_1 = arith.constant 0 : i32
    return %c0_i32, %c0_i32_0 : i32, i32
  }
  func.func @transform_6(%arg0: i32) -> (i32, i32) {
    %c0_i32 = arith.constant 0 : i32
    %c0_i32_0 = arith.constant 0 : i32
    %c0_i32_1 = arith.constant 0 : i32
    return %c0_i32, %c0_i32_0 : i32, i32
  }
  func.func @transform_7(%arg0: i32) -> (i32, i32, i32) {
    %c0_i32 = arith.constant 0 : i32
    %c0_i32_0 = arith.constant 0 : i32
    %c0_i32_1 = arith.constant 0 : i32
    return %arg0, %c0_i32, %c0_i32_0 : i32, i32, i32
  }
}

</mosaic_0001>

<llo_original>
// kernel: dnd_forward.1
$region0: #{dnd_forward.1}
  #allocation0 [shape = 'u32[]', space=smem, size = 0x4, offset = 0x4, fixed_abs, tag = 'smem constant byte address 0x4 - core index']
  #allocation1 [shape = 'u32[144,128]{1,0:T(1,128)}', space=vmem, size = 0x12000, scoped, tag = 'internal scratch']
  %s0 = inlined_call_operand.vmem [shape: f32[1,8,32], index: 0, kind: input, shape index: {}]
  %s1 = inlined_call_operand.hbm [shape: bf16[96,128], index: 1, kind: input, shape index: {}]
  %s2 = inlined_call_operand.vmem [shape: bf16[1,128], index: 2, kind: input, shape index: {}]
  %s3 = inlined_call_operand.hbm [shape: bf16[384,128], index: 3, kind: input, shape index: {}]
  %s4 = inlined_call_operand.vmem [shape: bf16[1,128], index: 4, kind: input, shape index: {}]
  %s5 = inlined_call_operand.hbm [shape: bf16[128,896], index: 5, kind: input, shape index: {}]
  %s6 = inlined_call_operand.hbm [shape: bf16[1,896], index: 6, kind: input, shape index: {}]
  %s7 = inlined_call_operand.vmem [shape: f32[1,1,896], index: 7, kind: output, shape index: {}]
  %s8 = sld [smem:[#allocation0]]
  $region54: #{dnd_forward.1} parent=0
    _
  %s10 = ssub.s32 1, %s8
  %s11 = scalar_select 0, %s10, %s8
  $region1: #{dnd_forward.1} parent=0
    #allocation2 [shape = 'u8[24576]{0}', space=vmem, size = 0x6000, scoped, tag = 'input window, operand 1, single buffered']
    #allocation3 [shape = 's32[1]{0}', space=sflag, size = 0x4, scoped, tag = 'scoped memory for dnd_forward.1']
    #allocation4 [shape = 'u8[98304]{0}', space=vmem, size = 0x18000, scoped, tag = 'input window, operand 3, single buffered']
    #allocation5 [shape = 's32[1]{0}', space=sflag, size = 0x4, scoped, tag = 'scoped memory for dnd_forward.1']
    #allocation6 [shape = 'u8[229376]{0}', space=vmem, size = 0x38000, scoped, tag = 'input window, operand 5, single buffered']
    #allocation7 [shape = 'u8[3584]{0}', space=vmem, size = 0x1000, scoped, tag = 'input window, operand 6, single buffered']
    #allocation8 [shape = 's32[1]{0}', space=sflag, size = 0x4, scoped, tag = 'scoped memory for dnd_forward.1']
    %12 = vsyncpa [#allocation3], 0
    %13 = vsyncpa [#allocation5], 0
    %14 = vsyncpa [#allocation8], 0
    // Predicated region
    $region2: #{dnd_forward.1} parent=1 // pred_check
      _
    $region3: #{dnd_forward.1} parent=1 // pred_check_branch
      %16 = sbr.rel (0) target = $region5
    $region4: #{dnd_forward.1} parent=1 // pred_region
      _
    $region5: #{dnd_forward.1} parent=1 // pred_fallthru
      _
    // Predicated region
    $region6: #{dnd_forward.1} parent=1 // pred_check
      _
    $region7: #{dnd_forward.1} parent=1 // pred_check_branch
      %18 = sbr.rel (0) target = $region9
    $region8: #{dnd_forward.1} parent=1 // pred_region
      %s20 = ssub.s32 768, 768
      %21 = vsyncadd [#allocation3], %s20
      %s22 = sshll.u32 [#allocation2], 4
      %s23 = int_to_ptr.vmem [resolvable:$true] %s22
      %28 = dma.hbm_to_vmem [thread:$0]  %s1, 768, %s23, [#allocation3], 64, 64, 4
    $region9: #{dnd_forward.1} parent=1 // pred_fallthru
      _
    // Predicated region
    $region10: #{dnd_forward.1} parent=1 // pred_check
      _
    $region11: #{dnd_forward.1} parent=1 // pred_check_branch
      %30 = sbr.rel (0) target = $region13
    $region12: #{dnd_forward.1} parent=1 // pred_region
      _
    $region13: #{dnd_forward.1} parent=1 // pred_fallthru
      _
    // Predicated region
    $region14: #{dnd_forward.1} parent=1 // pred_check
      _
    $region15: #{dnd_forward.1} parent=1 // pred_check_branch
      %32 = sbr.rel (0) target = $region17
    $region16: #{dnd_forward.1} parent=1 // pred_region
      %s34 = ssub.s32 3072, 3072
      %35 = vsyncadd [#allocation5], %s34
      %s36 = sshll.u32 [#allocation4], 4
      %s37 = int_to_ptr.vmem [resolvable:$true] %s36
      %42 = dma.hbm_to_vmem [thread:$0]  %s3, 3072, %s37, [#allocation5], 64, 64, 4
    $region17: #{dnd_forward.1} parent=1 // pred_fallthru
      _
    // Predicated region
    $region18: #{dnd_forward.1} parent=1 // pred_check
      _
    $region19: #{dnd_forward.1} parent=1 // pred_check_branch
      %44 = sbr.rel (0) target = $region21
    $region20: #{dnd_forward.1} parent=1 // pred_region
      _
    $region21: #{dnd_forward.1} parent=1 // pred_fallthru
      _
    // Predicated region
    $region22: #{dnd_forward.1} parent=1 // pred_check
      _
    $region23: #{dnd_forward.1} parent=1 // pred_check_branch
      %46 = sbr.rel (0) target = $region25
    $region24: #{dnd_forward.1} parent=1 // pred_region
      %s48 = ssub.s32 7168, 7168
      %49 = vsyncadd [#allocation5], %s48
      %s50 = sshll.u32 [#allocation6], 4
      %s51 = int_to_ptr.vmem [resolvable:$true] %s50
      %56 = dma.hbm_to_vmem [thread:$0]  %s5, 7168, %s51, [#allocation5], 448, 448, 28
    $region25: #{dnd_forward.1} parent=1 // pred_fallthru
      _
    // Predicated region
    $region26: #{dnd_forward.1} parent=1 // pred_check
      _
    $region27: #{dnd_forward.1} parent=1 // pred_check_branch
      %58 = sbr.rel (0) target = $region29
    $region28: #{dnd_forward.1} parent=1 // pred_region
      %s60 = ssub.s32 112, 112
      %61 = vsyncadd [#allocation8], %s60
      %s63 = sshll.u32 [#allocation7], 4
      %s64 = int_to_ptr.vmem [resolvable:$true] %s63
      %66 = dma.hbm_to_vmem [thread:$0]  %s6, 112, %s64, [#allocation8]
    $region29: #{dnd_forward.1} parent=1 // pred_fallthru
      _
    // Predicated region
    $region30: #{dnd_forward.1} parent=1 // pred_check
      _
    $region31: #{dnd_forward.1} parent=1 // pred_check_branch
      %68 = sbr.rel (0) target = $region33
    $region32: #{dnd_forward.1} parent=1 // pred_region
      %69 = dma.done [#allocation3], 768
    $region33: #{dnd_forward.1} parent=1 // pred_fallthru
      _
    // Predicated region
    $region34: #{dnd_forward.1} parent=1 // pred_check
      _
    $region35: #{dnd_forward.1} parent=1 // pred_check_branch
      %71 = sbr.rel (0) target = $region37
    $region36: #{dnd_forward.1} parent=1 // pred_region
      %72 = dma.done [#allocation5], 3072
    $region37: #{dnd_forward.1} parent=1 // pred_fallthru
      _
    // Predicated region
    $region38: #{dnd_forward.1} parent=1 // pred_check
      _
    $region39: #{dnd_forward.1} parent=1 // pred_check_branch
      %74 = sbr.rel (0) target = $region41
    $region40: #{dnd_forward.1} parent=1 // pred_region
      %75 = dma.done [#allocation5], 7168
    $region41: #{dnd_forward.1} parent=1 // pred_fallthru
      _
    // Predicated region
    $region42: #{dnd_forward.1} parent=1 // pred_check
      _
    $region43: #{dnd_forward.1} parent=1 // pred_check_branch
      %77 = sbr.rel (0) target = $region45
    $region44: #{dnd_forward.1} parent=1 // pred_region
      %78 = dma.done [#allocation8], 112
    $region45: #{dnd_forward.1} parent=1 // pred_fallthru
      _
    %v80 = vld [vmem:[%s0] sm:$0xff]
    %v81 = vlaneseq
    %v82 = vshrl.u32 %v81, 7
    %vm83 = vcmp.eq.s32.totalorder %v82, 0
    %v84 = vrot.slane %v80, 7
    %v85 = vsel %vm83, 0.0, %v84
    %vm86 = vcmp.eq.s32.totalorder %v82, 7
    %v87 = vrot.slane %v80, 1
    %v88 = vsel %vm86, 0.0, %v87
    %90 = vrot.lane.b32.xlu0 %v80, 32
    %v91 = vpop.permute.xlu0 %90
    %94 = vrot.lane.b32.xlu0 %v88, 64
    %v95 = vpop.permute.xlu0 %94
    %vm97 = vcmask 261120
    %v98 = vsel %vm97, %v85, %v91
    %vm99 = vcmask 523264
    %v100 = vsel %vm99, %v98, %v95
    %v101 = vpack.c.bf16 %v100, %v100
    %v102 = vld [vmem:[#allocation2] sm:$0xf]
    %v103 = vld [vmem:[#allocation2 + $0x4] sm:$0xf]
    %v104 = vld [vmem:[#allocation2 + $0x8] sm:$0xf]
    %v105 = vld [vmem:[#allocation2 + $0xc] sm:$0xf]
    %v106 = vld [vmem:[#allocation2 + $0x10] sm:$0xf]
    %v107 = vld [vmem:[#allocation2 + $0x14] sm:$0xf]
    %v108 = vld [vmem:[#allocation2 + $0x18] sm:$0xf]
    %v109 = vld [vmem:[#allocation2 + $0x1c] sm:$0xf]
    %v110 = vld [vmem:[#allocation2 + $0x20] sm:$0xf]
    %v111 = vld [vmem:[#allocation2 + $0x24] sm:$0xf]
    %v112 = vld [vmem:[#allocation2 + $0x28] sm:$0xf]
    %v113 = vld [vmem:[#allocation2 + $0x2c] sm:$0xf]
    %v114 = vld [vmem:[%s2] sm:$0x1]
    %v115 = vunpack.c.l.bf16 %v114
    %v116 = vlaneseq
    %v117 = vshrl.u32 %v116, 7
    %v118 = vsub.s32 0, %v117
    %v119 = vrot.slane %v115, %v118
    %v132 = vunpack.c.l.b16 %v102
    %v133 = vunpack.c.l.b16 %v103
    %v134 = vunpack.c.l.b16 %v104
    %v135 = vunpack.c.l.b16 %v105
    %v136 = vunpack.c.l.b16 %v106
    %v137 = vunpack.c.l.b16 %v107
    %v138 = vunpack.c.l.b16 %v108
    %v139 = vunpack.c.l.b16 %v109
    %v140 = vunpack.c.l.b16 %v110
    %v141 = vunpack.c.l.b16 %v111
    %v142 = vunpack.c.l.b16 %v112
    %v143 = vunpack.c.l.b16 %v113
    %v144 = vpack.c.b16 %v133, %v132
    %v145 = vpack.c.b16 %v135, %v134
    %v146 = vpack.c.b16 %v137, %v136
    %v147 = vpack.c.b16 %v139, %v138
    %v148 = vpack.c.b16 %v141, %v140
    %v149 = vpack.c.b16 %v143, %v142
    %vm156 = vcmask 785408
    %v158 = vsel %vm156, %v101, 0
    %160 = vmatprep.subr.bf16.mxu0 0
    %161 = vmatpush1.bf16.msra.mxu0 %v144
    %162 = vmatprep.subr.bf16.mxu0 0
    %163 = vmatpush1.bf16.msra.mxu0 %v145
    %164 = vmatprep.subr.bf16.mxu0 0
    %165 = vmatpush1.bf16.msra.mxu0 %v146
    %166 = vmatprep.subr.bf16.mxu0 0
    %167 = vmatpush1.bf16.msra.mxu0 %v147
    %168 = vmatprep.subr.bf16.mxu0 0
    %169 = vmatpush1.bf16.msra.mxu0 %v148
    %170 = vmatprep.subr.bf16.mxu0 0
    %171 = vmatpush1.bf16.msra.mxu0 %v149
    %172 = vmatprep.subr.bf16.mxu0 0
    %173 = vmatpush1.bf16.msra.mxu0 0
    %174 = vmatprep.subr.bf16.mxu0 0
    %175 = vmatpush1.bf16.msra.mxu0 0
    %176 = vmatprep.subr.bf16.mxu0 0
    %177 = vmatpush1.bf16.msra.mxu0 0
    %178 = vmatprep.subr.bf16.mxu0 0
    %179 = vmatpush1.bf16.msra.mxu0 0
    %180 = vmatprep.subr.bf16.mxu0 0
    %181 = vmatpush1.bf16.msra.mxu0 0
    %182 = vmatprep.subr.bf16.mxu0 0
    %183 = vmatpush1.bf16.msra.mxu0 0
    %184 = vmatprep.subr.bf16.mxu0 0
    %185 = vmatpush1.bf16.msra.mxu0 0
    %186 = vmatprep.subr.bf16.mxu0 0
    %187 = vmatpush1.bf16.msra.mxu0 0
    %188 = vmatprep.subr.bf16.mxu0 0
    %189 = vmatpush1.bf16.msra.mxu0 0
    %190 = vmatprep.subr.bf16.mxu0 0
    %191 = vmatpush1.bf16.msra.mxu0 0
    %192 = vmatprep.mubr.bf16.mxu0 0
    %193 = vmatmul.mubr.bf16.gmra.mrb[0].mxu0 %v158
    %v194 = vpop.f32.mrb[0].mxu0
    %v195 = vadd.f32 %v119, %v194
    %v196 = vpop.f32.mrb[0].mxu0
    %v197 = vpop.f32.mrb[0].mxu0
    %v198 = vpop.f32.mrb[0].mxu0
    %199 = vdwg.mxu0
    %v200 = vmul.f32 %v195, 0.5
    %v201 = vmul.f32 %v195, 0.044715
    %v202 = vmul.f32 %v201, %v195
    %v203 = vmul.f32 %v202, %v195
    %v204 = vadd.f32 %v195, %v203
    %v205 = vmul.f32 %v204, 0.7978846
    %v206 = vtanh.pop %v205
    %v207 = vadd.f32 %v206, 1.0
    %v208 = vmul.f32 %v200, %v207
    %v209 = vrot.slane %v208, 7
    %v210 = vsel %vm83, 0.0, %v209
    %v211 = vrot.slane %v208, 1
    %v212 = vsel %vm86, 0.0, %v211
    %v213 = vpack.c.bf16 %v210, %v210
    %v214 = vpack.c.bf16 %v208, %v208
    %v215 = vpack.c.bf16 %v212, %v212
    %v216 = vld [vmem:[#allocation4] sm:$0xf]
    %v217 = vld [vmem:[#allocation4 + $0x4] sm:$0xf]
    %v218 = vld [vmem:[#allocation4 + $0x8] sm:$0xf]
    %v219 = vld [vmem:[#allocation4 + $0xc] sm:$0xf]
    %v220 = vld [vmem:[#allocation4 + $0x10] sm:$0xf]
    %v221 = vld [vmem:[#allocation4 + $0x14] sm:$0xf]
    %v222 = vld [vmem:[#allocation4 + $0x18] sm:$0xf]
    %v223 = vld [vmem:[#allocation4 + $0x1c] sm:$0xf]
    %v224 = vld [vmem:[#allocation4 + $0x20] sm:$0xf]
    %v225 = vld [vmem:[#allocation4 + $0x24] sm:$0xf]
    %v226 = vld [vmem:[#allocation4 + $0x28] sm:$0xf]
    %v227 = vld [vmem:[#allocation4 + $0x2c] sm:$0xf]
    %v228 = vld [vmem:[#allocation4 + $0x30] sm:$0xf]
    %v229 = vld [vmem:[#allocation4 + $0x34] sm:$0xf]
    %v230 = vld [vmem:[#allocation4 + $0x38] sm:$0xf]
    %v231 = vld [vmem:[#allocation4 + $0x3c] sm:$0xf]
    %v232 = vld [vmem:[#allocation4 + $0x40] sm:$0xf]
    %v233 = vld [vmem:[#allocation4 + $0x44] sm:$0xf]
    %v234 = vld [vmem:[#allocation4 + $0x48] sm:$0xf]
    %v235 = vld [vmem:[#allocation4 + $0x4c] sm:$0xf]
    %v236 = vld [vmem:[#allocation4 + $0x50] sm:$0xf]
    %v237 = vld [vmem:[#allocation4 + $0x54] sm:$0xf]
    %v238 = vld [vmem:[#allocation4 + $0x58] sm:$0xf]
    %v239 = vld [vmem:[#allocation4 + $0x5c] sm:$0xf]
    %v240 = vld [vmem:[#allocation4 + $0x60] sm:$0xf]
    %v241 = vld [vmem:[#allocation4 + $0x64] sm:$0xf]
    %v242 = vld [vmem:[#allocation4 + $0x68] sm:$0xf]
    %v243 = vld [vmem:[#allocation4 + $0x6c] sm:$0xf]
    %v244 = vld [vmem:[#allocation4 + $0x70] sm:$0xf]
    %v245 = vld [vmem:[#allocation4 + $0x74] sm:$0xf]
    %v246 = vld [vmem:[#allocation4 + $0x78] sm:$0xf]
    %v247 = vld [vmem:[#allocation4 + $0x7c] sm:$0xf]
    %v248 = vld [vmem:[#allocation4 + $0x80] sm:$0xf]
    %v249 = vld [vmem:[#allocation4 + $0x84] sm:$0xf]
    %v250 = vld [vmem:[#allocation4 + $0x88] sm:$0xf]
    %v251 = vld [vmem:[#allocation4 + $0x8c] sm:$0xf]
    %v252 = vld [vmem:[#allocation4 + $0x90] sm:$0xf]
    %v253 = vld [vmem:[#allocation4 + $0x94] sm:$0xf]
    %v254 = vld [vmem:[#allocation4 + $0x98] sm:$0xf]
    %v255 = vld [vmem:[#allocation4 + $0x9c] sm:$0xf]
    %v256 = vld [vmem:[#allocation4 + $0xa0] sm:$0xf]
    %v257 = vld [vmem:[#allocation4 + $0xa4] sm:$0xf]
    %v258 = vld [vmem:[#allocation4 + $0xa8] sm:$0xf]
    %v259 = vld [vmem:[#allocation4 + $0xac] sm:$0xf]
    %v260 = vld [vmem:[#allocation4 + $0xb0] sm:$0xf]
    %v261 = vld [vmem:[#allocation4 + $0xb4] sm:$0xf]
    %v262 = vld [vmem:[#allocation4 + $0xb8] sm:$0xf]
    %v263 = vld [vmem:[#allocation4 + $0xbc] sm:$0xf]
    %v264 = vld [vmem:[%s4] sm:$0x1]
    %v265 = vunpack.c.l.bf16 %v264
    %v266 = vlaneseq
    %v267 = vshrl.u32 %v266, 7
    %v268 = vsub.s32 0, %v267
    %v269 = vrot.slane %v265, %v268
    %v318 = vunpack.c.l.b16 %v216
    %v319 = vunpack.c.l.b16 %v217
    %v320 = vunpack.c.l.b16 %v218
    %v321 = vunpack.c.l.b16 %v219
    %v322 = vunpack.c.l.b16 %v220
    %v323 = vunpack.c.l.b16 %v221
    %v324 = vunpack.c.l.b16 %v222
    %v325 = vunpack.c.l.b16 %v223
    %v326 = vunpack.c.l.b16 %v224
    %v327 = vunpack.c.l.b16 %v225
    %v328 = vunpack.c.l.b16 %v226
    %v329 = vunpack.c.l.b16 %v227
    %v330 = vunpack.c.l.b16 %v228
    %v331 = vunpack.c.l.b16 %v229
    %v332 = vunpack.c.l.b16 %v230
    %v333 = vunpack.c.l.b16 %v231
    %v334 = vunpack.c.l.b16 %v232
    %v335 = vunpack.c.l.b16 %v233
    %v336 = vunpack.c.l.b16 %v234
    %v337 = vunpack.c.l.b16 %v235
    %v338 = vunpack.c.l.b16 %v236
    %v339 = vunpack.c.l.b16 %v237
    %v340 = vunpack.c.l.b16 %v238
    %v341 = vunpack.c.l.b16 %v239
    %v342 = vunpack.c.l.b16 %v240
    %v343 = vunpack.c.l.b16 %v241
    %v344 = vunpack.c.l.b16 %v242
    %v345 = vunpack.c.l.b16 %v243
    %v346 = vunpack.c.l.b16 %v244
    %v347 = vunpack.c.l.b16 %v245
    %v348 = vunpack.c.l.b16 %v246
    %v349 = vunpack.c.l.b16 %v247
    %v350 = vunpack.c.l.b16 %v248
    %v351 = vunpack.c.l.b16 %v249
    %v352 = vunpack.c.l.b16 %v250
    %v353 = vunpack.c.l.b16 %v251
    %v354 = vunpack.c.l.b16 %v252
    %v355 = vunpack.c.l.b16 %v253
    %v356 = vunpack.c.l.b16 %v254
    %v357 = vunpack.c.l.b16 %v255
    %v358 = vunpack.c.l.b16 %v256
    %v359 = vunpack.c.l.b16 %v257
    %v360 = vunpack.c.l.b16 %v258
    %v361 = vunpack.c.l.b16 %v259
    %v362 = vunpack.c.l.b16 %v260
    %v363 = vunpack.c.l.b16 %v261
    %v364 = vunpack.c.l.b16 %v262
    %v365 = vunpack.c.l.b16 %v263
    %v366 = vpack.c.b16 %v319, %v318
    %v367 = vpack.c.b16 %v321, %v320
    %v368 = vpack.c.b16 %v323, %v322
    %v369 = vpack.c.b16 %v325, %v324
    %v370 = vpack.c.b16 %v327, %v326
    %v371 = vpack.c.b16 %v329, %v328
    %v372 = vpack.c.b16 %v331, %v330
    %v373 = vpack.c.b16 %v333, %v332
    %v374 = vpack.c.b16 %v335, %v334
    %v375 = vpack.c.b16 %v337, %v336
    %v376 = vpack.c.b16 %v339, %v338
    %v377 = vpack.c.b16 %v341, %v340
    %v378 = vpack.c.b16 %v343, %v342
    %v379 = vpack.c.b16 %v345, %v344
    %v380 = vpack.c.b16 %v347, %v346
    %v381 = vpack.c.b16 %v349, %v348
    %v382 = vpack.c.b16 %v351, %v350
    %v383 = vpack.c.b16 %v353, %v352
    %v384 = vpack.c.b16 %v355, %v354
    %v385 = vpack.c.b16 %v357, %v356
    %v386 = vpack.c.b16 %v359, %v358
    %v387 = vpack.c.b16 %v361, %v360
    %v388 = vpack.c.b16 %v363, %v362
    %v389 = vpack.c.b16 %v365, %v364
    %414 = vmatprep.subr.bf16.mxu0 0
    %415 = vmatpush1.bf16.msra.mxu0 %v366
    %416 = vmatprep.subr.bf16.mxu0 0
    %417 = vmatpush1.bf16.msra.mxu0 %v367
    %418 = vmatprep.subr.bf16.mxu0 0
    %419 = vmatpush1.bf16.msra.mxu0 %v368
    %420 = vmatprep.subr.bf16.mxu0 0
    %421 = vmatpush1.bf16.msra.mxu0 %v369
    %422 = vmatprep.subr.bf16.mxu0 0
    %423 = vmatpush1.bf16.msra.mxu0 %v370
    %424 = vmatprep.subr.bf16.mxu0 0
    %425 = vmatpush1.bf16.msra.mxu0 %v371
    %426 = vmatprep.subr.bf16.mxu0 0
    %427 = vmatpush1.bf16.msra.mxu0 %v372
    %428 = vmatprep.subr.bf16.mxu0 0
    %429 = vmatpush1.bf16.msra.mxu0 %v373
    %430 = vmatprep.subr.bf16.mxu0 0
    %431 = vmatpush1.bf16.msra.mxu0 %v374
    %432 = vmatprep.subr.bf16.mxu0 0
    %433 = vmatpush1.bf16.msra.mxu0 %v375
    %434 = vmatprep.subr.bf16.mxu0 0
    %435 = vmatpush1.bf16.msra.mxu0 %v376
    %436 = vmatprep.subr.bf16.mxu0 0
    %437 = vmatpush1.bf16.msra.mxu0 %v377
    %438 = vmatprep.subr.bf16.mxu0 0
    %439 = vmatpush1.bf16.msra.mxu0 %v378
    %440 = vmatprep.subr.bf16.mxu0 0
    %441 = vmatpush1.bf16.msra.mxu0 %v379
    %442 = vmatprep.subr.bf16.mxu0 0
    %443 = vmatpush1.bf16.msra.mxu0 %v380
    %444 = vmatprep.subr.bf16.mxu0 0
    %445 = vmatpush1.bf16.msra.mxu0 %v381
    %446 = vmatprep.mubr.bf16.mxu0 %v214
    %447 = vmatmul.mubr.bf16.gmra.mrb[0].mxu0 %v213
    %v448 = vpop.f32.mrb[0].mxu0
    %v449 = vadd.f32 %v269, %v448
    %v450 = vpop.f32.mrb[0].mxu0
    %v451 = vpop.f32.mrb[0].mxu0
    %v452 = vpop.f32.mrb[0].mxu0
    %453 = vdwg.mxu0
    %454 = vmatprep.subr.bf16.mxu0 0
    %455 = vmatpush1.bf16.msra.mxu0 %v382
    %456 = vmatprep.subr.bf16.mxu0 0
    %457 = vmatpush1.bf16.msra.mxu0 %v383
    %458 = vmatprep.subr.bf16.mxu0 0
    %459 = vmatpush1.bf16.msra.mxu0 %v384
    %460 = vmatprep.subr.bf16.mxu0 0
    %461 = vmatpush1.bf16.msra.mxu0 %v385
    %462 = vmatprep.subr.bf16.mxu0 0
    %463 = vmatpush1.bf16.msra.mxu0 %v386
    %464 = vmatprep.subr.bf16.mxu0 0
    %465 = vmatpush1.bf16.msra.mxu0 %v387
    %466 = vmatprep.subr.bf16.mxu0 0
    %467 = vmatpush1.bf16.msra.mxu0 %v388
    %468 = vmatprep.subr.bf16.mxu0 0
    %469 = vmatpush1.bf16.msra.mxu0 %v389
    %470 = vmatprep.subr.bf16.mxu0 0
    %471 = vmatpush1.bf16.msra.mxu0 0
    %472 = vmatprep.subr.bf16.mxu0 0
    %473 = vmatpush1.bf16.msra.mxu0 0
    %474 = vmatprep.subr.bf16.mxu0 0
    %475 = vmatpush1.bf16.msra.mxu0 0
    %476 = vmatprep.subr.bf16.mxu0 0
    %477 = vmatpush1.bf16.msra.mxu0 0
    %478 = vmatprep.subr.bf16.mxu0 0
    %479 = vmatpush1.bf16.msra.mxu0 0
    %480 = vmatprep.subr.bf16.mxu0 0
    %481 = vmatpush1.bf16.msra.mxu0 0
    %482 = vmatprep.subr.bf16.mxu0 0
    %483 = vmatpush1.bf16.msra.mxu0 0
    %484 = vmatprep.subr.bf16.mxu0 0
    %485 = vmatpush1.bf16.msra.mxu0 0
    %486 = vmatprep.mubr.bf16.mxu0 0
    %487 = vmatmul.mubr.bf16.gmra.mrb[0].mxu0 %v215
    %v488 = vpop.f32.mrb[0].mxu0
    %v489 = vadd.f32 %v449, %v488
    %v490 = vpop.f32.mrb[0].mxu0
    %v491 = vpop.f32.mrb[0].mxu0
    %v492 = vpop.f32.mrb[0].mxu0
    %493 = vdwg.mxu0
    %v494 = vmul.f32 %v489, 0.5
    %v495 = vmul.f32 %v489, 0.044715
    %v496 = vmul.f32 %v495, %v489
    %v497 = vmul.f32 %v496, %v489
    %v498 = vadd.f32 %v489, %v497
    %v499 = vmul.f32 %v498, 0.7978846
    %v500 = vtanh.pop %v499
    %v501 = vadd.f32 %v500, 1.0
    %v502 = vmul.f32 %v494, %v501
    %v503 = vrot.slane %v502, 4
    %v504 = vadd.f32 %v502, %v503
    %v505 = vrot.slane %v504, 2
    %v506 = vadd.f32 %v504, %v505
    %v507 = vrot.slane %v506, 1
    %v508 = vadd.f32 %v506, %v507
    %v509 = vpack.c.bf16 %v508, %v508
    %v510 = vld [vmem:[#allocation6] sm:$0xff]
    %v511 = vld [vmem:[#allocation6 + $0x8] sm:$0xff]
    %v512 = vld [vmem:[#allocation6 + $0x10] sm:$0xff]
    %v513 = vld [vmem:[#allocation6 + $0x18] sm:$0xf]
    %v514 = vld [vmem:[#allocation6 + $0x1c] sm:$0xff]
    %v515 = vld [vmem:[#allocation6 + $0x24] sm:$0xff]
    %v516 = vld [vmem:[#allocation6 + $0x2c] sm:$0xff]
    %v517 = vld [vmem:[#allocation6 + $0x34] sm:$0xf]
    %v518 = vld [vmem:[#allocation6 + $0x38] sm:$0xff]
    %v519 = vld [vmem:[#allocation6 + $0x40] sm:$0xff]
    %v520 = vld [vmem:[#allocation6 + $0x48] sm:$0xff]
    %v521 = vld [vmem:[#allocation6 + $0x50] sm:$0xf]
    %v522 = vld [vmem:[#allocation6 + $0x54] sm:$0xff]
    %v523 = vld [vmem:[#allocation6 + $0x5c] sm:$0xff]
    %v524 = vld [vmem:[#allocation6 + $0x64] sm:$0xff]
    %v525 = vld [vmem:[#allocation6 + $0x6c] sm:$0xf]
    %v526 = vld [vmem:[#allocation6 + $0x70] sm:$0xff]
    %v527 = vld [vmem:[#allocation6 + $0x78] sm:$0xff]
    %v528 = vld [vmem:[#allocation6 + $0x80] sm:$0xff]
    %v529 = vld [vmem:[#allocation6 + $0x88] sm:$0xf]
    %v530 = vld [vmem:[#allocation6 + $0x8c] sm:$0xff]
    %v531 = vld [vmem:[#allocation6 + $0x94] sm:$0xff]
    %v532 = vld [vmem:[#allocation6 + $0x9c] sm:$0xff]
    %v533 = vld [vmem:[#allocation6 + $0xa4] sm:$0xf]
    %v534 = vld [vmem:[#allocation6 + $0xa8] sm:$0xff]
    %v535 = vld [vmem:[#allocation6 + $0xb0] sm:$0xff]
    %v536 = vld [vmem:[#allocation6 + $0xb8] sm:$0xff]
    %v537 = vld [vmem:[#allocation6 + $0xc0] sm:$0xf]
    %v538 = vld [vmem:[#allocation6 + $0xc4] sm:$0xff]
    %v539 = vld [vmem:[#allocation6 + $0xcc] sm:$0xff]
    %v540 = vld [vmem:[#allocation6 + $0xd4] sm:$0xff]
    %v541 = vld [vmem:[#allocation6 + $0xdc] sm:$0xf]
    %v542 = vld [vmem:[#allocation6 + $0xe0] sm:$0xff]
    %v543 = vld [vmem:[#allocation6 + $0xe8] sm:$0xff]
    %v544 = vld [vmem:[#allocation6 + $0xf0] sm:$0xff]
    %v545 = vld [vmem:[#allocation6 + $0xf8] sm:$0xf]
    %v546 = vld [vmem:[#allocation6 + $0xfc] sm:$0xff]
    %v547 = vld [vmem:[#allocation6 + $0x104] sm:$0xff]
    %v548 = vld [vmem:[#allocation6 + $0x10c] sm:$0xff]
    %v549 = vld [vmem:[#allocation6 + $0x114] sm:$0xf]
    %v550 = vld [vmem:[#allocation6 + $0x118] sm:$0xff]
    %v551 = vld [vmem:[#allocation6 + $0x120] sm:$0xff]
    %v552 = vld [vmem:[#allocation6 + $0x128] sm:$0xff]
    %v553 = vld [vmem:[#allocation6 + $0x130] sm:$0xf]
    %v554 = vld [vmem:[#allocation6 + $0x134] sm:$0xff]
    %v555 = vld [vmem:[#allocation6 + $0x13c] sm:$0xff]
    %v556 = vld [vmem:[#allocation6 + $0x144] sm:$0xff]
    %v557 = vld [vmem:[#allocation6 + $0x14c] sm:$0xf]
    %v558 = vld [vmem:[#allocation6 + $0x150] sm:$0xff]
    %v559 = vld [vmem:[#allocation6 + $0x158] sm:$0xff]
    %v560 = vld [vmem:[#allocation6 + $0x160] sm:$0xff]
    %v561 = vld [vmem:[#allocation6 + $0x168] sm:$0xf]
    %v562 = vld [vmem:[#allocation6 + $0x16c] sm:$0xff]
    %v563 = vld [vmem:[#allocation6 + $0x174] sm:$0xff]
    %v564 = vld [vmem:[#allocation6 + $0x17c] sm:$0xff]
    %v565 = vld [vmem:[#allocation6 + $0x184] sm:$0xf]
    %v566 = vld [vmem:[#allocation6 + $0x188] sm:$0xff]
    %v567 = vld [vmem:[#allocation6 + $0x190] sm:$0xff]
    %v568 = vld [vmem:[#allocation6 + $0x198] sm:$0xff]
    %v569 = vld [vmem:[#allocation6 + $0x1a0] sm:$0xf]
    %v570 = vld [vmem:[#allocation6 + $0x1a4] sm:$0xff]
    %v571 = vld [vmem:[#allocation6 + $0x1ac] sm:$0xff]
    %v572 = vld [vmem:[#allocation6 + $0x1b4] sm:$0xff]
    %v573 = vld [vmem:[#allocation6 + $0x1bc] sm:$0xf]
    %v574 = vld [vmem:[#allocation7] sm:$0x7f]
    %v575 = vunpack.c.l.bf16 %v574
    %v576 = vunpack.c.h.bf16 %v574
    %v641 = vunpack.c.l.b16 %v510
    %v642 = vunpack.c.h.b16 %v510
    %v643 = vunpack.c.l.b16 %v511
    %v644 = vunpack.c.h.b16 %v511
    %v645 = vunpack.c.l.b16 %v512
    %v646 = vunpack.c.h.b16 %v512
    %v647 = vunpack.c.l.b16 %v513
    %v648 = vunpack.c.l.b16 %v514
    %v649 = vunpack.c.h.b16 %v514
    %v650 = vunpack.c.l.b16 %v515
    %v651 = vunpack.c.h.b16 %v515
    %v652 = vunpack.c.l.b16 %v516
    %v653 = vunpack.c.h.b16 %v516
    %v654 = vunpack.c.l.b16 %v517
    %v655 = vunpack.c.l.b16 %v518
    %v656 = vunpack.c.h.b16 %v518
    %v657 = vunpack.c.l.b16 %v519
    %v658 = vunpack.c.h.b16 %v519
    %v659 = vunpack.c.l.b16 %v520
    %v660 = vunpack.c.h.b16 %v520
    %v661 = vunpack.c.l.b16 %v521
    %v662 = vunpack.c.l.b16 %v522
    %v663 = vunpack.c.h.b16 %v522
    %v664 = vunpack.c.l.b16 %v523
    %v665 = vunpack.c.h.b16 %v523
    %v666 = vunpack.c.l.b16 %v524
    %v667 = vunpack.c.h.b16 %v524
    %v668 = vunpack.c.l.b16 %v525
    %v669 = vunpack.c.l.b16 %v526
    %v670 = vunpack.c.h.b16 %v526
    %v671 = vunpack.c.l.b16 %v527
    %v672 = vunpack.c.h.b16 %v527
    %v673 = vunpack.c.l.b16 %v528
    %v674 = vunpack.c.h.b16 %v528
    %v675 = vunpack.c.l.b16 %v529
    %v676 = vunpack.c.l.b16 %v530
    %v677 = vunpack.c.h.b16 %v530
    %v678 = vunpack.c.l.b16 %v531
    %v679 = vunpack.c.h.b16 %v531
    %v680 = vunpack.c.l.b16 %v532
    %v681 = vunpack.c.h.b16 %v532
    %v682 = vunpack.c.l.b16 %v533
    %v683 = vunpack.c.l.b16 %v534
    %v684 = vunpack.c.h.b16 %v534
    %v685 = vunpack.c.l.b16 %v535
    %v686 = vunpack.c.h.b16 %v535
    %v687 = vunpack.c.l.b16 %v536
    %v688 = vunpack.c.h.b16 %v536
    %v689 = vunpack.c.l.b16 %v537
    %v690 = vunpack.c.l.b16 %v538
    %v691 = vunpack.c.h.b16 %v538
    %v692 = vunpack.c.l.b16 %v539
    %v693 = vunpack.c.h.b16 %v539
    %v694 = vunpack.c.l.b16 %v540
    %v695 = vunpack.c.h.b16 %v540
    %v696 = vunpack.c.l.b16 %v541
    %v697 = vunpack.c.l.b16 %v542
    %v698 = vunpack.c.h.b16 %v542
    %v699 = vunpack.c.l.b16 %v543
    %v700 = vunpack.c.h.b16 %v543
    %v701 = vunpack.c.l.b16 %v544
    %v702 = vunpack.c.h.b16 %v544
    %v703 = vunpack.c.l.b16 %v545
    %v704 = vunpack.c.l.b16 %v546
    %v705 = vunpack.c.h.b16 %v546
    %v706 = vunpack.c.l.b16 %v547
    %v707 = vunpack.c.h.b16 %v547
    %v708 = vunpack.c.l.b16 %v548
    %v709 = vunpack.c.h.b16 %v548
    %v710 = vunpack.c.l.b16 %v549
    %v711 = vunpack.c.l.b16 %v550
    %v712 = vunpack.c.h.b16 %v550
    %v713 = vunpack.c.l.b16 %v551
    %v714 = vunpack.c.h.b16 %v551
    %v715 = vunpack.c.l.b16 %v552
    %v716 = vunpack.c.h.b16 %v552
    %v717 = vunpack.c.l.b16 %v553
    %v718 = vunpack.c.l.b16 %v554
    %v719 = vunpack.c.h.b16 %v554
    %v720 = vunpack.c.l.b16 %v555
    %v721 = vunpack.c.h.b16 %v555
    %v722 = vunpack.c.l.b16 %v556
    %v723 = vunpack.c.h.b16 %v556
    %v724 = vunpack.c.l.b16 %v557
    %v725 = vunpack.c.l.b16 %v558
    %v726 = vunpack.c.h.b16 %v558
    %v727 = vunpack.c.l.b16 %v559
    %v728 = vunpack.c.h.b16 %v559
    %v729 = vunpack.c.l.b16 %v560
    %v730 = vunpack.c.h.b16 %v560
    %v731 = vunpack.c.l.b16 %v561
    %v732 = vunpack.c.l.b16 %v562
    %v733 = vunpack.c.h.b16 %v562
    %v734 = vunpack.c.l.b16 %v563
    %v735 = vunpack.c.h.b16 %v563
    %v736 = vunpack.c.l.b16 %v564
    %v737 = vunpack.c.h.b16 %v564
    %v738 = vunpack.c.l.b16 %v565
    %v739 = vunpack.c.l.b16 %v566
    %v740 = vunpack.c.h.b16 %v566
    %v741 = vunpack.c.l.b16 %v567
    %v742 = vunpack.c.h.b16 %v567
    %v743 = vunpack.c.l.b16 %v568
    %v744 = vunpack.c.h.b16 %v568
    %v745 = vunpack.c.l.b16 %v569
    %v746 = vunpack.c.l.b16 %v570
    %v747 = vunpack.c.h.b16 %v570
    %v748 = vunpack.c.l.b16 %v571
    %v749 = vunpack.c.h.b16 %v571
    %v750 = vunpack.c.l.b16 %v572
    %v751 = vunpack.c.h.b16 %v572
    %v752 = vunpack.c.l.b16 %v573
    %v753 = vpack.c.b16 %v648, %v641
    %v754 = vpack.c.b16 %v649, %v642
    %v755 = vpack.c.b16 %v650, %v643
    %v756 = vpack.c.b16 %v651, %v644
    %v757 = vpack.c.b16 %v652, %v645
    %v758 = vpack.c.b16 %v653, %v646
    %v759 = vpack.c.b16 %v654, %v647
    %v760 = vpack.c.b16 %v662, %v655
    %v761 = vpack.c.b16 %v663, %v656
    %v762 = vpack.c.b16 %v664, %v657
    %v763 = vpack.c.b16 %v665, %v658
    %v764 = vpack.c.b16 %v666, %v659
    %v765 = vpack.c.b16 %v667, %v660
    %v766 = vpack.c.b16 %v668, %v661
    %v767 = vpack.c.b16 %v676, %v669
    %v768 = vpack.c.b16 %v677, %v670
    %v769 = vpack.c.b16 %v678, %v671
    %v770 = vpack.c.b16 %v679, %v672
    %v771 = vpack.c.b16 %v680, %v673
    %v772 = vpack.c.b16 %v681, %v674
    %v773 = vpack.c.b16 %v682, %v675
    %v774 = vpack.c.b16 %v690, %v683
    %v775 = vpack.c.b16 %v691, %v684
    %v776 = vpack.c.b16 %v692, %v685
    %v777 = vpack.c.b16 %v693, %v686
    %v778 = vpack.c.b16 %v694, %v687
    %v779 = vpack.c.b16 %v695, %v688
    %v780 = vpack.c.b16 %v696, %v689
    %v781 = vpack.c.b16 %v704, %v697
    %v782 = vpack.c.b16 %v705, %v698
    %v783 = vpack.c.b16 %v706, %v699
    %v784 = vpack.c.b16 %v707, %v700
    %v785 = vpack.c.b16 %v708, %v701
    %v786 = vpack.c.b16 %v709, %v702
    %v787 = vpack.c.b16 %v710, %v703
    %v788 = vpack.c.b16 %v718, %v711
    %v789 = vpack.c.b16 %v719, %v712
    %v790 = vpack.c.b16 %v720, %v713
    %v791 = vpack.c.b16 %v721, %v714
    %v792 = vpack.c.b16 %v722, %v715
    %v793 = vpack.c.b16 %v723, %v716
    %v794 = vpack.c.b16 %v724, %v717
    %v795 = vpack.c.b16 %v732, %v725
    %v796 = vpack.c.b16 %v733, %v726
    %v797 = vpack.c.b16 %v734, %v727
    %v798 = vpack.c.b16 %v735, %v728
    %v799 = vpack.c.b16 %v736, %v729
    %v800 = vpack.c.b16 %v737, %v730
    %v801 = vpack.c.b16 %v738, %v731
    %v802 = vpack.c.b16 %v746, %v739
    %v803 = vpack.c.b16 %v747, %v740
    %v804 = vpack.c.b16 %v748, %v741
    %v805 = vpack.c.b16 %v749, %v742
    %v806 = vpack.c.b16 %v750, %v743
    %v807 = vpack.c.b16 %v751, %v744
    %v808 = vpack.c.b16 %v752, %v745
    %v867 = vlaneseq
    %v868 = vshrl.u32 %v867, 7
    %v869 = vsub.s32 0, %v868
    %v870 = vrot.slane %v575, %v869
    %v871 = vlaneseq
    %v872 = vshrl.u32 %v871, 7
    %v873 = vsub.s32 2, %v872
    %v874 = vrot.slane %v575, %v873
    %v875 = vlaneseq
    %v876 = vshrl.u32 %v875, 7
    %v877 = vsub.s32 4, %v876
    %v878 = vrot.slane %v575, %v877
    %v879 = vlaneseq
    %v880 = vshrl.u32 %v879, 7
    %v881 = vsub.s32 6, %v880
    %v882 = vrot.slane %v575, %v881
    %v883 = vlaneseq
    %v884 = vshrl.u32 %v883, 7
    %v885 = vsub.s32 0, %v884
    %v886 = vrot.slane %v576, %v885
    %v887 = vlaneseq
    %v888 = vshrl.u32 %v887, 7
    %v889 = vsub.s32 2, %v888
    %v890 = vrot.slane %v576, %v889
    %v891 = vlaneseq
    %v892 = vshrl.u32 %v891, 7
    %v893 = vsub.s32 4, %v892
    %v894 = vrot.slane %v576, %v893
    %902 = vmatprep.subr.bf16.mxu0 %v754
    %903 = vmatpush1.bf16.msra.mxu0 %v753
    %904 = vmatprep.subr.bf16.mxu0 %v761
    %905 = vmatpush1.bf16.msra.mxu0 %v760
    %906 = vmatprep.subr.bf16.mxu0 %v768
    %907 = vmatpush1.bf16.msra.mxu0 %v767
    %908 = vmatprep.subr.bf16.mxu0 %v775
    %909 = vmatpush1.bf16.msra.mxu0 %v774
    %910 = vmatprep.subr.bf16.mxu0 %v782
    %911 = vmatpush1.bf16.msra.mxu0 %v781
    %912 = vmatprep.subr.bf16.mxu0 %v789
    %913 = vmatpush1.bf16.msra.mxu0 %v788
    %914 = vmatprep.subr.bf16.mxu0 %v796
    %915 = vmatpush1.bf16.msra.mxu0 %v795
    %916 = vmatprep.subr.bf16.mxu0 %v803
    %917 = vmatpush1.bf16.msra.mxu0 %v802
    %918 = vmatprep.subr.bf16.mxu0 0
    %919 = vmatpush1.bf16.msra.mxu0 0
    %920 = vmatprep.subr.bf16.mxu0 0
    %921 = vmatpush1.bf16.msra.mxu0 0
    %922 = vmatprep.subr.bf16.mxu0 0
    %923 = vmatpush1.bf16.msra.mxu0 0
    %924 = vmatprep.subr.bf16.mxu0 0
    %925 = vmatpush1.bf16.msra.mxu0 0
    %926 = vmatprep.subr.bf16.mxu0 0
    %927 = vmatpush1.bf16.msra.mxu0 0
    %928 = vmatprep.subr.bf16.mxu0 0
    %929 = vmatpush1.bf16.msra.mxu0 0
    %930 = vmatprep.subr.bf16.mxu0 0
    %931 = vmatpush1.bf16.msra.mxu0 0
    %932 = vmatprep.subr.bf16.mxu0 0
    %933 = vmatpush1.bf16.msra.mxu0 0
    %934 = vmatprep.mubr.bf16.mxu0 0
    %935 = vmatmul.mubr.bf16.gmra.mrb[0].mxu0 %v509
    %v936 = vpop.f32.mrb[0].mxu0
    %v937 = vadd.f32 %v870, %v936
    %v938 = vpop.f32.mrb[0].mxu0
    %v939 = vadd.f32 %v874, %v938
    %v940 = vpop.f32.mrb[0].mxu0
    %v941 = vpop.f32.mrb[0].mxu0
    %942 = vdwg.mxu0
    %943 = vmatprep.subr.bf16.mxu0 %v756
    %944 = vmatpush1.bf16.msra.mxu0 %v755
    %945 = vmatprep.subr.bf16.mxu0 %v763
    %946 = vmatpush1.bf16.msra.mxu0 %v762
    %947 = vmatprep.subr.bf16.mxu0 %v770
    %948 = vmatpush1.bf16.msra.mxu0 %v769
    %949 = vmatprep.subr.bf16.mxu0 %v777
    %950 = vmatpush1.bf16.msra.mxu0 %v776
    %951 = vmatprep.subr.bf16.mxu0 %v784
    %952 = vmatpush1.bf16.msra.mxu0 %v783
    %953 = vmatprep.subr.bf16.mxu0 %v791
    %954 = vmatpush1.bf16.msra.mxu0 %v790
    %955 = vmatprep.subr.bf16.mxu0 %v798
    %956 = vmatpush1.bf16.msra.mxu0 %v797
    %957 = vmatprep.subr.bf16.mxu0 %v805
    %958 = vmatpush1.bf16.msra.mxu0 %v804
    %959 = vmatprep.subr.bf16.mxu0 0
    %960 = vmatpush1.bf16.msra.mxu0 0
    %961 = vmatprep.subr.bf16.mxu0 0
    %962 = vmatpush1.bf16.msra.mxu0 0
    %963 = vmatprep.subr.bf16.mxu0 0
    %964 = vmatpush1.bf16.msra.mxu0 0
    %965 = vmatprep.subr.bf16.mxu0 0
    %966 = vmatpush1.bf16.msra.mxu0 0
    %967 = vmatprep.subr.bf16.mxu0 0
    %968 = vmatpush1.bf16.msra.mxu0 0
    %969 = vmatprep.subr.bf16.mxu0 0
    %970 = vmatpush1.bf16.msra.mxu0 0
    %971 = vmatprep.subr.bf16.mxu0 0
    %972 = vmatpush1.bf16.msra.mxu0 0
    %973 = vmatprep.subr.bf16.mxu0 0
    %974 = vmatpush1.bf16.msra.mxu0 0
    %975 = vmatprep.mubr.bf16.mxu0 0
    %976 = vmatmul.mubr.bf16.gmra.mrb[0].mxu0 %v509
    %v977 = vpop.f32.mrb[0].mxu0
    %v978 = vadd.f32 %v878, %v977
    %v979 = vpop.f32.mrb[0].mxu0
    %v980 = vadd.f32 %v882, %v979
    %v981 = vpop.f32.mrb[0].mxu0
    %v982 = vpop.f32.mrb[0].mxu0
    %983 = vdwg.mxu0
    %984 = vmatprep.subr.bf16.mxu0 %v758
    %985 = vmatpush1.bf16.msra.mxu0 %v757
    %986 = vmatprep.subr.bf16.mxu0 %v765
    %987 = vmatpush1.bf16.msra.mxu0 %v764
    %988 = vmatprep.subr.bf16.mxu0 %v772
    %989 = vmatpush1.bf16.msra.mxu0 %v771
    %990 = vmatprep.subr.bf16.mxu0 %v779
    %991 = vmatpush1.bf16.msra.mxu0 %v778
    %992 = vmatprep.subr.bf16.mxu0 %v786
    %993 = vmatpush1.bf16.msra.mxu0 %v785
    %994 = vmatprep.subr.bf16.mxu0 %v793
    %995 = vmatpush1.bf16.msra.mxu0 %v792
    %996 = vmatprep.subr.bf16.mxu0 %v800
    %997 = vmatpush1.bf16.msra.mxu0 %v799
    %998 = vmatprep.subr.bf16.mxu0 %v807
    %999 = vmatpush1.bf16.msra.mxu0 %v806
    %1000 = vmatprep.subr.bf16.mxu0 0
    %1001 = vmatpush1.bf16.msra.mxu0 0
    %1002 = vmatprep.subr.bf16.mxu0 0
    %1003 = vmatpush1.bf16.msra.mxu0 0
    %1004 = vmatprep.subr.bf16.mxu0 0
    %1005 = vmatpush1.bf16.msra.mxu0 0
    %1006 = vmatprep.subr.bf16.mxu0 0
    %1007 = vmatpush1.bf16.msra.mxu0 0
    %1008 = vmatprep.subr.bf16.mxu0 0
    %1009 = vmatpush1.bf16.msra.mxu0 0
    %1010 = vmatprep.subr.bf16.mxu0 0
    %1011 = vmatpush1.bf16.msra.mxu0 0
    %1012 = vmatprep.subr.bf16.mxu0 0
    %1013 = vmatpush1.bf16.msra.mxu0 0
    %1014 = vmatprep.subr.bf16.mxu0 0
    %1015 = vmatpush1.bf16.msra.mxu0 0
    %1016 = vmatprep.mubr.bf16.mxu0 0
    %1017 = vmatmul.mubr.bf16.gmra.mrb[0].mxu0 %v509
    %v1018 = vpop.f32.mrb[0].mxu0
    %v1019 = vadd.f32 %v886, %v1018
    %v1020 = vpop.f32.mrb[0].mxu0
    %v1021 = vadd.f32 %v890, %v1020
    %v1022 = vpop.f32.mrb[0].mxu0
    %v1023 = vpop.f32.mrb[0].mxu0
    %1024 = vdwg.mxu0
    %1025 = vmatprep.subr.bf16.mxu0 0
    %1026 = vmatpush1.bf16.msra.mxu0 %v759
    %1027 = vmatprep.subr.bf16.mxu0 0
    %1028 = vmatpush1.bf16.msra.mxu0 %v766
    %1029 = vmatprep.subr.bf16.mxu0 0
    %1030 = vmatpush1.bf16.msra.mxu0 %v773
    %1031 = vmatprep.subr.bf16.mxu0 0
    %1032 = vmatpush1.bf16.msra.mxu0 %v780
    %1033 = vmatprep.subr.bf16.mxu0 0
    %1034 = vmatpush1.bf16.msra.mxu0 %v787
    %1035 = vmatprep.subr.bf16.mxu0 0
    %1036 = vmatpush1.bf16.msra.mxu0 %v794
    %1037 = vmatprep.subr.bf16.mxu0 0
    %1038 = vmatpush1.bf16.msra.mxu0 %v801
    %1039 = vmatprep.subr.bf16.mxu0 0
    %1040 = vmatpush1.bf16.msra.mxu0 %v808
    %1041 = vmatprep.subr.bf16.mxu0 0
    %1042 = vmatpush1.bf16.msra.mxu0 0
    %1043 = vmatprep.subr.bf16.mxu0 0
    %1044 = vmatpush1.bf16.msra.mxu0 0
    %1045 = vmatprep.subr.bf16.mxu0 0
    %1046 = vmatpush1.bf16.msra.mxu0 0
    %1047 = vmatprep.subr.bf16.mxu0 0
    %1048 = vmatpush1.bf16.msra.mxu0 0
    %1049 = vmatprep.subr.bf16.mxu0 0
    %1050 = vmatpush1.bf16.msra.mxu0 0
    %1051 = vmatprep.subr.bf16.mxu0 0
    %1052 = vmatpush1.bf16.msra.mxu0 0
    %1053 = vmatprep.subr.bf16.mxu0 0
    %1054 = vmatpush1.bf16.msra.mxu0 0
    %1055 = vmatprep.subr.bf16.mxu0 0
    %1056 = vmatpush1.bf16.msra.mxu0 0
    %1057 = vmatprep.mubr.bf16.mxu0 0
    %1058 = vmatmul.mubr.bf16.gmra.mrb[0].mxu0 %v509
    %v1059 = vpop.f32.mrb[0].mxu0
    %v1060 = vadd.f32 %v894, %v1059
    %v1061 = vpop.f32.mrb[0].mxu0
    %v1062 = vpop.f32.mrb[0].mxu0
    %v1063 = vpop.f32.mrb[0].mxu0
    %1064 = vdwg.mxu0
    %v1072 = vcombine.low %v937, %v939
    %v1073 = vcombine.low %v978, %v980
    %v1074 = vcombine.low %v1019, %v1021
    %v1076 = vunpack.c.l.s4 1966171168
    %v1077 = vunpack.c.0.s8 %v1076
    %v1078 = vlaneseq
    %v1079 = vshrl.u32 %v1078, 7
    %v1080 = vsub.s32 %v1077, %v1079
    %v1081 = vrot.slane %v1072, %v1080
    %v1083 = vunpack.c.l.s4 1966171168
    %v1084 = vunpack.c.0.s8 %v1083
    %v1085 = vlaneseq
    %v1086 = vshrl.u32 %v1085, 7
    %v1087 = vsub.s32 %v1084, %v1086
    %v1088 = vrot.slane %v1073, %v1087
    %v1090 = vunpack.c.l.s4 1966171168
    %v1091 = vunpack.c.0.s8 %v1090
    %v1092 = vlaneseq
    %v1093 = vshrl.u32 %v1092, 7
    %v1094 = vsub.s32 %v1091, %v1093
    %v1095 = vrot.slane %v1074, %v1094
    %v1097 = vunpack.c.l.s4 1966171168
    %v1098 = vunpack.c.0.s8 %v1097
    %v1099 = vlaneseq
    %v1100 = vshrl.u32 %v1099, 7
    %v1101 = vsub.s32 %v1098, %v1100
    %v1102 = vrot.slane %v1060, %v1101
    %v1103 = vcombine.low %v1081, %v1088
    %v1104 = vcombine.low %v1095, %v1102
    %v1106 = vunpack.c.l.s4 1966171168
    %v1107 = vunpack.c.0.s8 %v1106
    %v1108 = vlaneseq
    %v1109 = vshrl.u32 %v1108, 7
    %v1110 = vsub.s32 %v1107, %v1109
    %v1111 = vrot.slane %v1103, %v1110
    %v1113 = vunpack.c.l.s4 1966171168
    %v1114 = vunpack.c.0.s8 %v1113
    %v1115 = vlaneseq
    %v1116 = vshrl.u32 %v1115, 7
    %v1117 = vsub.s32 %v1114, %v1116
    %v1118 = vrot.slane %v1104, %v1117
    %v1119 = vcombine.low %v1111, %v1118
    %v1121 = vlaneseq
    %vm1122 = vcmp.ge.s32.totalorder %v1121, 0
    %vm1123 = vcmp.lt.s32.totalorder %v1121, 896
    %vm1124 = vmand %vm1122, %vm1123
    %1125 = vst.msk [vmem:[%s7] sm:$0x7f] %vm1124, %v1119
    // Predicated region
    $region46: #{dnd_forward.1} parent=1 // pred_check
      _
    $region47: #{dnd_forward.1} parent=1 // pred_check_branch
      %1127 = sbr.rel (0) target = $region49
    $region48: #{dnd_forward.1} parent=1 // pred_region
      _
    $region49: #{dnd_forward.1} parent=1 // pred_fallthru
      _
    // Predicated region
    $region50: #{dnd_forward.1} parent=1 // pred_check
      _
    $region51: #{dnd_forward.1} parent=1 // pred_check_branch
      %1129 = sbr.rel (0) target = $region53
    $region52: #{dnd_forward.1} parent=1 // pred_region
      _
    $region53: #{dnd_forward.1} parent=1 // pred_fallthru
      _
    %1130 = vsyncpa [#allocation3], 1
    %1131 = vsyncpa [#allocation5], 1
    %1132 = vsyncpa [#allocation8], 1

</llo_original>
